<compile_context>
chip_gen: v5e
topology: v5e:2x2
jax: 0.10.0
libtpu: 0.0.40
codegen_flags: <defaults>
</compile_context>

<pallas_src>
import functools

import jax
import jax.numpy as jnp
from jax.experimental import pallas as pl
from jax.experimental.pallas import tpu as pltpu


# ---------------------------------------------------------------------------
# Kernels: x block is (Bt, C, T); reduce over the channel axis (axis=1).
# One-pass statistics: mu = s1/C, var = E[x^2] - mu^2 (fp32 accumulation).
# ---------------------------------------------------------------------------
def _ln_withbias_kernel(x_ref, w_ref, b_ref, o_ref):
    x = x_ref[...].astype(jnp.float32)                     # (Bt, C, T)
    c = x.shape[1]
    inv_c = 1.0 / c
    s1 = jnp.sum(x, axis=1, keepdims=True)                 # (Bt, 1, T)
    s2 = jnp.sum(x * x, axis=1, keepdims=True)             # (Bt, 1, T)
    mu = s1 * inv_c
    var = s2 * inv_c - mu * mu                             # unbiased=False
    inv = jax.lax.rsqrt(var + 1e-5)                        # EUP
    w = w_ref[...].astype(jnp.float32)[None]               # (1, C, 1)
    b = b_ref[...].astype(jnp.float32)[None]               # (1, C, 1)
    o_ref[...] = (((x - mu) * inv) * w + b).astype(o_ref.dtype)


def _ln_biasfree_kernel(x_ref, w_ref, o_ref):
    x = x_ref[...].astype(jnp.float32)                     # (Bt, C, T)
    c = x.shape[1]
    inv_c = 1.0 / c
    s1 = jnp.sum(x, axis=1, keepdims=True)
    s2 = jnp.sum(x * x, axis=1, keepdims=True)
    mu = s1 * inv_c
    var = s2 * inv_c - mu * mu                             # torch.var(unbiased=False)
    inv = jax.lax.rsqrt(var + 1e-5)
    w = w_ref[...].astype(jnp.float32)[None]               # (1, C, 1)
    # NOTE: BiasFree_LayerNorm multiplies x (NOT x - mu) — intentional.
    o_ref[...] = (x * inv * w).astype(o_ref.dtype)


# ---------------------------------------------------------------------------
# Generation-aware VMEM limit (v5e/v6e: 128 MiB physical, v7x: 64 MiB).
# ---------------------------------------------------------------------------
def _vmem_limit_bytes():
    cap = None
    try:
        cap = getattr(pltpu.get_tpu_info(), "vmem_capacity_bytes", None)
    except Exception:
        cap = None
    if cap is None:
        cap = 64 * 1024 * 1024            # unknown -> assume v7x-class (safe)
    if cap >= 128 * 1024 * 1024:
        return 64 * 1024 * 1024           # v5e / v6e: plenty of headroom
    return 48 * 1024 * 1024               # v7x: 64 MiB physical per TC


# ---------------------------------------------------------------------------
# Tile selection: biggest lane-aligned HW tile such that
#   2x double-buffered input + 2x double-buffered output (native dtype,
#   sublane-padded C) + ~3 fp32 full-block temporaries  <=  0.75 * vmem_limit.
# ---------------------------------------------------------------------------
def _pick_hw_tile(hw, c, itemsize, vmem_limit):
    budget = (vmem_limit * 3) // 4
    # Sublane packing of the channel (second-minor) axis: 8 rows per 32-bit
    # sublane, sub-32-bit dtypes pack more rows per sublane group.
    pack = max(1, 4 // max(1, itemsize))
    c_pad_native = -(-c // (8 * pack)) * (8 * pack)
    c_pad_f32 = -(-c // 8) * 8
    per_lane = 4 * c_pad_native * itemsize + 3 * c_pad_f32 * 4
    t = budget // max(1, per_lane)
    t = (t // 128) * 128
    t = max(128, t)                        # floor (huge-C edge case)
    if t >= hw:
        return hw                          # full dim is always a legal block dim
    return t                               # multiple of 128; ragged last tile OK


def _pick_batch_tile(b, hw):
    # Pack enough images per step to reach ~16K lane-elements of work, but
    # keep Bt a divisor of B so every block is exact.
    bt = max(1, min(b, 16384 // max(1, hw)))
    while b % bt != 0:
        bt -= 1
    return bt


@functools.partial(jax.jit, static_argnames=("layernorm_type",))
def layernorm(x, weight, bias, layernorm_type="WithBias"):
    """x: (B, C, H, W) NCHW, matching the PyTorch module."""
    B, C, H, W = x.shape
    HW = H * W
    x3 = x.reshape(B, C, HW)               # free reshape, no data movement

    itemsize = jnp.dtype(x.dtype).itemsize
    vmem_limit = _vmem_limit_bytes()

    if HW < 128:
        # Small spatial extent: amortize per-step overhead by packing several
        # batch entries into one block (stores stay masked, overhead drops).
        bt = _pick_batch_tile(B, HW)
        grid = (B // bt, 1)
        x_spec = pl.BlockSpec((bt, C, HW), lambda b, j: (b, 0, 0))
    else:
        t = _pick_hw_tile(HW, C, itemsize, vmem_limit)
        if B == 1 and t >= HW and HW >= 256:
            # Guarantee >= 2 grid steps so both v7x TensorCores get work.
            t = max(128, ((pl.cdiv(HW, 2) + 127) // 128) * 128)
        grid = (B, pl.cdiv(HW, t))
        x_spec = pl.BlockSpec((1, C, t), lambda b, j: (b, 0, j))

    w2 = weight.reshape(C, 1)
    b2 = bias.reshape(C, 1)
    p_spec = pl.BlockSpec((C, 1), lambda b, j: (0, 0))

    compiler_params = pltpu.CompilerParams(
        dimension_semantics=("parallel", "parallel"),
        vmem_limit_bytes=vmem_limit,
    )

    if layernorm_type == "BiasFree":
        out3 = pl.pallas_call(
            _ln_biasfree_kernel,
            out_shape=jax.ShapeDtypeStruct((B, C, HW), x.dtype),
            grid_spec=pltpu.PrefetchScalarGridSpec(
                num_scalar_prefetch=0,
                grid=grid,
                in_specs=[x_spec, p_spec],
                out_specs=x_spec,
            ),
            compiler_params=compiler_params,
        )(x3, w2)
    else:
        out3 = pl.pallas_call(
            _ln_withbias_kernel,
            out_shape=jax.ShapeDtypeStruct((B, C, HW), x.dtype),
            grid_spec=pltpu.PrefetchScalarGridSpec(
                num_scalar_prefetch=0,
                grid=grid,
                in_specs=[x_spec, p_spec, p_spec],
                out_specs=x_spec,
            ),
            compiler_params=compiler_params,
        )(x3, w2, b2)

    return out3.reshape(B, C, H, W)


# ---------------------------------------------------------------------------
# Pure-JAX reference matching the PyTorch module exactly (to_3d / to_4d).
# ---------------------------------------------------------------------------
def layernorm_ref(x, weight, bias, layernorm_type="WithBias"):
    B, C, H, W = x.shape
    x3d = jnp.transpose(x, (0, 2, 3, 1)).reshape(B, H * W, C).astype(jnp.float32)
    mu = jnp.mean(x3d, axis=-1, keepdims=True)
    var = jnp.mean((x3d - mu) ** 2, axis=-1, keepdims=True)
    if layernorm_type == "BiasFree":
        y = x3d / jnp.sqrt(var + 1e-5) * weight.astype(jnp.float32)
    else:
        y = (x3d - mu) / jnp.sqrt(var + 1e-5) * weight.astype(jnp.float32) \
            + bias.astype(jnp.float32)
    y = y.astype(x.dtype)
    return jnp.transpose(y.reshape(B, H, W, C), (0, 3, 1, 2))


if __name__ == "__main__":
    key = jax.random.PRNGKey(0)
    ok = True

    # (2,4,16,16): module-scale input; (1,4,7,9): odd small spatial (HW<128,
    # batch-packed path); (1,8,64,64): B=1 large-HW -> forced >=2 grid steps.
    shapes = [(2, 4, 16, 16), (1, 4, 7, 9), (1, 8, 64, 64)]
    for (B, C, H, W) in shapes:
        key, kx, kw, kb = jax.random.split(key, 4)
        x = jax.random.normal(kx, (B, C, H, W), dtype=jnp.float32)
        # Module init is ones/zeros; use random params to exercise the affine.
        weight = 1.0 + 0.1 * jax.random.normal(kw, (C,), dtype=jnp.float32)
        bias = 0.1 * jax.random.normal(kb, (C,), dtype=jnp.float32)

        for ln_type in ("WithBias", "BiasFree"):
            out = layernorm(x, weight, bias, layernorm_type=ln_type)
            out = jax.block_until_ready(out)
            ref = layernorm_ref(x, weight, bias, layernorm_type=ln_type)
            if out.shape != (B, C, H, W):
                ok = False
            if not jnp.allclose(out, ref, atol=1e-5, rtol=1e-5):
                ok = False

    if ok:
        print("KERNEL_OK")
</pallas_src>

<mosaic_0001>
module attributes {stable_mosaic.version = 11 : i64} {
  func.func @_ln_withbias_kernel(%arg0: i32, %arg1: i32, %arg2: memref<1x4x256xf32, #tpu.memory_space<vmem>>, %arg3: memref<4x1xf32, #tpu.memory_space<vmem>>, %arg4: memref<4x1xf32, #tpu.memory_space<vmem>>, %arg5: memref<1x4x256xf32, #tpu.memory_space<vmem>>) attributes {dimension_semantics = [#tpu.dimension_semantics<parallel>, #tpu.dimension_semantics<parallel>], iteration_bounds = array<i64: 2, 1>, scalar_prefetch = 0 : i64, scratch_operands = 0 : i64, tpu.core_type = #tpu.core_type<tc>, window_params = [{transform_indices = @transform_0, window_bounds = array<i64: 1, 4, 256>}, {pipeline_mode = #tpu.pipeline_mode<synchronous>, transform_indices = @transform_1, window_bounds = array<i64: 4, 1>}, {pipeline_mode = #tpu.pipeline_mode<synchronous>, transform_indices = @transform_2, window_bounds = array<i64: 4, 1>}, {transform_indices = @transform_3, window_bounds = array<i64: 1, 4, 256>}]} {
    %c0 = arith.constant 0 : index
    %c0_0 = arith.constant 0 : index
    %c0_1 = arith.constant 0 : index
    %0 = vector.load %arg2[%c0, %c0_0, %c0_1] : memref<1x4x256xf32, #tpu.memory_space<vmem>>, vector<1x4x256xf32>
    %cst = arith.constant dense<0.000000e+00> : vector<1x256xf32>
    %1 = vector.multi_reduction <add>, %0, %cst [1] : vector<1x4x256xf32> to vector<1x256xf32>
    %2 = vector.shape_cast %1 : vector<1x256xf32> to vector<1x1x256xf32>
    %3 = arith.mulf %0, %0 : vector<1x4x256xf32>
    %cst_2 = arith.constant dense<0.000000e+00> : vector<1x256xf32>
    %4 = vector.multi_reduction <add>, %3, %cst_2 [1] : vector<1x4x256xf32> to vector<1x256xf32>
    %5 = vector.shape_cast %4 : vector<1x256xf32> to vector<1x1x256xf32>
    %cst_3 = arith.constant 2.500000e-01 : f32
    %6 = vector.broadcast %cst_3 : f32 to vector<1x1x256xf32>
    %7 = arith.mulf %2, %6 : vector<1x1x256xf32>
    %cst_4 = arith.constant 2.500000e-01 : f32
    %8 = vector.broadcast %cst_4 : f32 to vector<1x1x256xf32>
    %9 = arith.mulf %5, %8 : vector<1x1x256xf32>
    %10 = arith.mulf %7, %7 : vector<1x1x256xf32>
    %11 = arith.subf %9, %10 : vector<1x1x256xf32>
    %cst_5 = arith.constant 9.99999974E-6 : f32
    %12 = vector.broadcast %cst_5 : f32 to vector<1x1x256xf32>
    %13 = arith.addf %11, %12 : vector<1x1x256xf32>
    %14 = math.rsqrt %13 : vector<1x1x256xf32>
    %c0_6 = arith.constant 0 : index
    %c0_7 = arith.constant 0 : index
    %15 = vector.load %arg3[%c0_6, %c0_7] : memref<4x1xf32, #tpu.memory_space<vmem>>, vector<4x1xf32>
    %16 = vector.shape_cast %15 : vector<4x1xf32> to vector<1x4x1xf32>
    %c0_8 = arith.constant 0 : index
    %c0_9 = arith.constant 0 : index
    %17 = vector.load %arg4[%c0_8, %c0_9] : memref<4x1xf32, #tpu.memory_space<vmem>>, vector<4x1xf32>
    %18 = vector.shape_cast %17 : vector<4x1xf32> to vector<1x4x1xf32>
    %19 = vector.broadcast %7 : vector<1x1x256xf32> to vector<1x4x256xf32>
    %20 = arith.subf %0, %19 : vector<1x4x256xf32>
    %21 = vector.broadcast %14 : vector<1x1x256xf32> to vector<1x4x256xf32>
    %22 = arith.mulf %20, %21 : vector<1x4x256xf32>
    %23 = vector.broadcast %16 : vector<1x4x1xf32> to vector<1x4x256xf32>
    %24 = arith.mulf %22, %23 : vector<1x4x256xf32>
    %25 = vector.broadcast %18 : vector<1x4x1xf32> to vector<1x4x256xf32>
    %26 = arith.addf %24, %25 : vector<1x4x256xf32>
    %c0_10 = arith.constant 0 : index
    %c0_11 = arith.constant 0 : index
    %c0_12 = arith.constant 0 : index
    %27 = vector.load %arg5[%c0_10, %c0_11, %c0_12] : memref<1x4x256xf32, #tpu.memory_space<vmem>>, vector<1x4x256xf32>
    tpu.vector_store %arg5[%c0_10, %c0_11, %c0_12], %26 {strides = array<i32>} : memref<1x4x256xf32, #tpu.memory_space<vmem>>, vector<1x4x256xf32>,
    return
  }
  func.func @transform_0(%arg0: i32, %arg1: i32) -> (i32, i32, i32) {
    %c0_i32 = arith.constant 0 : i32
    %c0_i32_0 = arith.constant 0 : i32
    return %arg0, %c0_i32, %arg1 : i32, i32, i32
  }
  func.func @transform_1(%arg0: i32, %arg1: i32) -> (i32, i32) {
    %c0_i32 = arith.constant 0 : i32
    %c0_i32_0 = arith.constant 0 : i32
    %c0_i32_1 = arith.constant 0 : i32
    return %c0_i32, %c0_i32_0 : i32, i32
  }
  func.func @transform_2(%arg0: i32, %arg1: i32) -> (i32, i32) {
    %c0_i32 = arith.constant 0 : i32
    %c0_i32_0 = arith.constant 0 : i32
    %c0_i32_1 = arith.constant 0 : i32
    return %c0_i32, %c0_i32_0 : i32, i32
  }
  func.func @transform_3(%arg0: i32, %arg1: i32) -> (i32, i32, i32) {
    %c0_i32 = arith.constant 0 : i32
    %c0_i32_0 = arith.constant 0 : i32
    return %arg0, %c0_i32, %arg1 : i32, i32, i32
  }
}

</mosaic_0001>

<llo_original>
// kernel: layernorm.1
$region0: #{layernorm.1}
  #allocation0 [shape = 'u32[]', space=smem, size = 0x4, offset = 0x4, fixed_abs, tag = 'smem constant byte address 0x4 - core index']
  #allocation1 [shape = 'u32[72,128]{1,0:T(1,128)}', space=vmem, size = 0x9000, scoped, tag = 'internal scratch']
  %s0 = inlined_call_operand.vmem [shape: f32[2,4,256], index: 0, kind: input, shape index: {}]
  %s1 = inlined_call_operand.vmem [shape: f32[4,1], index: 1, kind: input, shape index: {}]
  %s2 = inlined_call_operand.vmem [shape: f32[4,1], index: 2, kind: input, shape index: {}]
  %s3 = inlined_call_operand.vmem [shape: f32[2,4,256], index: 3, kind: output, shape index: {}]
  %s4 = sld [smem:[#allocation0]]
  $region45: #{layernorm.1} parent=0
    _
  %s6 = ssub.s32 1, %s4
  %s7 = scalar_select 0, %s6, %s4
  loop: start=0, step=1, limit=4
  $region2: #{layernorm.1} parent=0 // loop_pre_header
    _
  $region3: #{layernorm.1} parent=0 // loop_header
    %s9 = sphi 0, %s13
    %p10 = scmp.ge.s32.totalorder %s9, 4
    %s16 = sphi 0, %s28
    %s17 = sphi 0, %s24
    %s18 = sphi 0, %s16
    %s19 = sphi 0, %s17
    %s20 = sphi 0, %s18
    %s21 = sphi 0, %s19
    %s33 = sphi 0, %s35
    %s36 = sphi 0, %s33
    %s37 = sphi 0, %s36
    %s53 = sphi 0, %s37
    %s57 = sphi 0, %s57
    %s59 = sphi 0, %s57
    %s60 = sphi 0, %s59
    %s74 = sphi 0, %s60
    %s78 = sphi 0, %s78
    %s80 = sphi 0, %s78
    %s81 = sphi 0, %s80
    %s95 = sphi 0, %s81
    %s103 = sphi 0, %s105
    %s106 = sphi 0, %s103
    %s107 = sphi 0, %s106
    %s123 = sphi 0, %s107
  $region4: #{layernorm.1} parent=0 // loop_header_branch
    %12 = sbr.rel (%p10) target = $region8
  $region5: #{layernorm.1} parent=0 // loop_body
    %s14 = ssub.s32 %s9, 1
    %s15 = ssub.s32 %s9, 2
    %s22 = sadd.s32 1, %s17
    %p23 = scmp.ge.s32.totalorder %s22, 1
    %s24 = scalar_select %p23, 0, %s22
    %s25 = sadd.s32 1, %s16
    %s26 = scalar_select %p23, %s25, %s16
    %p27 = scmp.ge.s32.totalorder %s26, 2
    %s28 = scalar_select %p27, 0, %s26
    %s29 = ssub.s32 %s16, %s28
    %s30 = ssub.s32 %s17, %s24
    %s31 = sor.u32 %s29, %s30
    %p32 = scmp.eq.s32.totalorder %s31, 0
    %s34 = sadd.s32 %s33, 1
    %s35 = scalar_select %p32, %s33, %s34
    %p38 = pneg %p32
    %p39 = scmp.eq.s32.totalorder %s9, 1
    %p40 = por %p38, %p39
    %p41 = scmp.ne.s32.totalorder %s33, %s36
    %p42 = scmp.eq.s32.totalorder %s9, 0
    %p43 = por %p41, %p42
    %p44 = scmp.ne.s32.totalorder %s33, %s36
    %p45 = scmp.eq.s32.totalorder %s14, 1
    %p46 = por %p44, %p45
    %p47 = scmp.ne.s32.totalorder %s36, %s37
    %p48 = scmp.eq.s32.totalorder %s14, 0
    %p49 = por %p47, %p48
    %p50 = scmp.ne.s32.totalorder %s36, %s37
    %p51 = scmp.eq.s32.totalorder %s15, 1
    %p52 = por %p50, %p51
    %p54 = scmp.ne.s32.totalorder %s37, %s53
    %p55 = scmp.eq.s32.totalorder %s15, 0
    %p56 = por %p54, %p55
    %s58 = sadd.s32 %s57, 1
    %p61 = scmp.eq.s32.totalorder %s9, 1
    %p62 = scmp.ne.s32.totalorder %s57, %s59
    %p63 = scmp.eq.s32.totalorder %s9, 0
    %p64 = por %p62, %p63
    %p65 = scmp.ne.s32.totalorder %s57, %s59
    %p66 = scmp.eq.s32.totalorder %s14, 1
    %p67 = por %p65, %p66
    %p68 = scmp.ne.s32.totalorder %s59, %s60
    %p69 = scmp.eq.s32.totalorder %s14, 0
    %p70 = por %p68, %p69
    %p71 = scmp.ne.s32.totalorder %s59, %s60
    %p72 = scmp.eq.s32.totalorder %s15, 1
    %p73 = por %p71, %p72
    %p75 = scmp.ne.s32.totalorder %s60, %s74
    %p76 = scmp.eq.s32.totalorder %s15, 0
    %p77 = por %p75, %p76
    %s79 = sadd.s32 %s78, 1
    %p82 = scmp.eq.s32.totalorder %s9, 1
    %p83 = scmp.ne.s32.totalorder %s78, %s80
    %p84 = scmp.eq.s32.totalorder %s9, 0
    %p85 = por %p83, %p84
    %p86 = scmp.ne.s32.totalorder %s78, %s80
    %p87 = scmp.eq.s32.totalorder %s14, 1
    %p88 = por %p86, %p87
    %p89 = scmp.ne.s32.totalorder %s80, %s81
    %p90 = scmp.eq.s32.totalorder %s14, 0
    %p91 = por %p89, %p90
    %p92 = scmp.ne.s32.totalorder %s80, %s81
    %p93 = scmp.eq.s32.totalorder %s15, 1
    %p94 = por %p92, %p93
    %p96 = scmp.ne.s32.totalorder %s81, %s95
    %p97 = scmp.eq.s32.totalorder %s15, 0
    %p98 = por %p96, %p97
    %s99 = ssub.s32 %s16, %s28
    %s100 = ssub.s32 %s17, %s24
    %s101 = sor.u32 %s99, %s100
    %p102 = scmp.eq.s32.totalorder %s101, 0
    %s104 = sadd.s32 %s103, 1
    %s105 = scalar_select %p102, %s103, %s104
    %p108 = pneg %p102
    %p109 = scmp.eq.s32.totalorder %s9, 1
    %p110 = por %p108, %p109
    %p111 = scmp.ne.s32.totalorder %s103, %s106
    %p112 = scmp.eq.s32.totalorder %s9, 0
    %p113 = por %p111, %p112
    %p114 = scmp.ne.s32.totalorder %s103, %s106
    %p115 = scmp.eq.s32.totalorder %s14, 1
    %p116 = por %p114, %p115
    %p117 = scmp.ne.s32.totalorder %s106, %s107
    %p118 = scmp.eq.s32.totalorder %s14, 0
    %p119 = por %p117, %p118
    %p120 = scmp.ne.s32.totalorder %s106, %s107
    %p121 = scmp.eq.s32.totalorder %s15, 1
    %p122 = por %p120, %p121
    %p124 = scmp.ne.s32.totalorder %s107, %s123
    %p125 = scmp.eq.s32.totalorder %s15, 0
    %p126 = por %p124, %p125
    %p127 = scmp.le.s32.totalorder 1, %s9
    %p128 = scmp.lt.s32.totalorder %s9, 3
    %p129 = pnand %p127, %p128
    %p130 = pneg %p129
    // Predicated region
    $region9: #{layernorm.1} parent=5 // pred_check
      _
    $region10: #{layernorm.1} parent=5 // pred_check_branch
      %132 = sbr.rel (%p129) target = $region12
    $region11: #{layernorm.1} parent=5 // pred_region
      %s133 = ssub.s32 %s9, 1
      // Predicated region
      $region13: #{layernorm.1} parent=11 // pred_check
        %p134 = pneg %p70
      $region14: #{layernorm.1} parent=11 // pred_check_branch
        %136 = sbr.rel (%p134) target = $region16
      $region15: #{layernorm.1} parent=11 // pred_region
        _
      $region16: #{layernorm.1} parent=11 // pred_fallthru
        _
      // Predicated region
      $region17: #{layernorm.1} parent=11 // pred_check
        %p137 = pneg %p91
      $region18: #{layernorm.1} parent=11 // pred_check_branch
        %139 = sbr.rel (%p137) target = $region20
      $region19: #{layernorm.1} parent=11 // pred_region
        _
      $region20: #{layernorm.1} parent=11 // pred_fallthru
        _
    $region12: #{layernorm.1} parent=5 // pred_fallthru
      _
    %p140 = scmp.lt.s32.totalorder %s9, 2
    // Predicated region
    $region21: #{layernorm.1} parent=5 // pred_check
      %p141 = pneg %p140
    $region22: #{layernorm.1} parent=5 // pred_check_branch
      %143 = sbr.rel (%p141) target = $region24
    $region23: #{layernorm.1} parent=5 // pred_region
      // Predicated region
      $region25: #{layernorm.1} parent=23 // pred_check
        %p144 = pneg %p43
      $region26: #{layernorm.1} parent=23 // pred_check_branch
        %146 = sbr.rel (%p144) target = $region28
      $region27: #{layernorm.1} parent=23 // pred_region
        %s147 = smul.u32 2, %s17
        %p148 = scmp.lt.s32.totalorder %s16, 1
        %s149 = scalar_select %p148, %s16, 1
        %p150 = scmp.lt.s32.totalorder %s147, 1
        %s151 = scalar_select %p150, %s147, 1
        %s152 = smul.addr %s149, 2
        %s153 = sadd.s32 %s151, %s152
        %s154 = smul.addr %s153, 4
        %s155 = scalar_lea.vmem %s0, %s154
        %s156 = smul.u32 2, %s17
      $region28: #{layernorm.1} parent=23 // pred_fallthru
        _
    $region24: #{layernorm.1} parent=5 // pred_fallthru
      _
    %p157 = scmp.le.s32.totalorder 1, %s9
    %p158 = scmp.lt.s32.totalorder %s9, 3
    %p159 = pnand %p157, %p158
    %p160 = pneg %p159
    // Predicated region
    $region29: #{layernorm.1} parent=5 // pred_check
      _
    $region30: #{layernorm.1} parent=5 // pred_check_branch
      %162 = sbr.rel (%p159) target = $region32
    $region31: #{layernorm.1} parent=5 // pred_region
      %s163 = ssub.s32 %s9, 1
      %s164 = smul.u32 2, %s19
      %p165 = scmp.lt.s32.totalorder %s18, 1
      %s166 = scalar_select %p165, %s18, 1
      %p167 = scmp.lt.s32.totalorder %s164, 1
      %s168 = scalar_select %p167, %s164, 1
      %s169 = smul.addr %s166, 2
      %s170 = sadd.s32 %s168, %s169
      %s171 = smul.addr %s170, 4
      %s172 = scalar_lea.vmem %s0, %s171
      %p173 = pneg %p49
      %p174 = pneg %p46
      %p175 = pneg %p70
      %p176 = pneg %p67
      %p177 = pneg %p91
      %p178 = pneg %p88
      %p179 = pneg %p119
      %p180 = pneg %p116
      %s181 = smul.u32 2, %s19
      %p182 = scmp.lt.s32.totalorder %s18, 1
      %s183 = scalar_select %p182, %s18, 1
      %p184 = scmp.lt.s32.totalorder %s181, 1
      %s185 = scalar_select %p184, %s181, 1
      %s186 = smul.addr %s183, 2
      %s187 = sadd.s32 %s185, %s186
      %s188 = smul.addr %s187, 4
      %s189 = scalar_lea.vmem %s3, %s188
      %s190 = smul.u32 2, %s19
      %p191 = scmp.lt.s32.totalorder %s18, 1
      %s192 = scalar_select %p191, %s18, 1
      %p193 = scmp.lt.s32.totalorder %s190, 1
      %s194 = scalar_select %p193, %s190, 1
      %s195 = smul.addr %s192, 2
      %s196 = sadd.s32 %s194, %s195
      %s197 = smul.addr %s196, 4
      %s198 = scalar_lea.vmem %s0, %s197
      %s199 = smul.u32 2, %s19
      %s200 = smul.u32 2, %s19
      %p201 = scmp.lt.s32.totalorder %s18, 1
      %s202 = scalar_select %p201, %s18, 1
      %p203 = scmp.lt.s32.totalorder %s200, 1
      %s204 = scalar_select %p203, %s200, 1
      %s205 = smul.addr %s202, 2
      %s206 = sadd.s32 %s204, %s205
      %s207 = smul.addr %s206, 4
      %s208 = scalar_lea.vmem %s3, %s207
      %s209 = smul.u32 2, %s19
      %v210 = vld [vmem:[%s198] sm:$0xff]
      %212 = vst [vmem:[#allocation1] ss:$2 sm:$0xff] %v210
      %v213 = vld.sshfl [vmem:[#allocation1] sm:$0xff pattern:$0x75316420]
      %v214 = vld.sshfl [vmem:[#allocation1 + $0x8] sm:$0xff pattern:$0x75316420]
      %vm217 = vcmask 1043456
      %v218 = vsel %vm217, %v213, 0.0
      %v219 = vrot.slane %v218, 4
      %v220 = vadd.f32 %v218, %v219
      %v221 = vrot.slane %v220, 2
      %v222 = vadd.f32 %v220, %v221
      %v223 = vrot.slane %v222, 1
      %v224 = vadd.f32 %v222, %v223
      %v225 = vsel %vm217, %v214, 0.0
      %v226 = vrot.slane %v225, 4
      %v227 = vadd.f32 %v225, %v226
      %v228 = vrot.slane %v227, 2
      %v229 = vadd.f32 %v227, %v228
      %v230 = vrot.slane %v229, 1
      %v231 = vadd.f32 %v229, %v230
      %v232 = vmul.f32 %v210, %v210
      %234 = vst [vmem:[#allocation1] ss:$2 sm:$0xff] %v232
      %v235 = vld.sshfl [vmem:[#allocation1] sm:$0xff pattern:$0x75316420]
      %v236 = vld.sshfl [vmem:[#allocation1 + $0x8] sm:$0xff pattern:$0x75316420]
      %v239 = vsel %vm217, %v235, 0.0
      %v240 = vrot.slane %v239, 4
      %v241 = vadd.f32 %v239, %v240
      %v242 = vrot.slane %v241, 2
      %v243 = vadd.f32 %v241, %v242
      %v244 = vrot.slane %v243, 1
      %v245 = vadd.f32 %v243, %v244
      %v246 = vsel %vm217, %v236, 0.0
      %v247 = vrot.slane %v246, 4
      %v248 = vadd.f32 %v246, %v247
      %v249 = vrot.slane %v248, 2
      %v250 = vadd.f32 %v248, %v249
      %v251 = vrot.slane %v250, 1
      %v252 = vadd.f32 %v250, %v251
      %v253 = vmul.f32 %v224, 0.25
      %v254 = vmul.f32 %v231, 0.25
      %v255 = vmul.f32 %v245, 0.25
      %v256 = vmul.f32 %v252, 0.25
      %v257 = vmul.f32 %v253, %v253
      %v258 = vmul.f32 %v254, %v254
      %v259 = vsub.f32 %v255, %v257
      %v260 = vsub.f32 %v256, %v258
      %v261 = vadd.f32 %v259, 1e-05
      %v262 = vadd.f32 %v260, 1e-05
      %v263 = vrsqrt.pop %v261
      %v264 = vmul.f32 %v263, %v261
      %v265 = vmul.f32 %v264, %v263
      %v266 = vmul.f32 0.5, %v265
      %v267 = vsub.f32 1.5, %v266
      %v268 = vmul.f32 %v263, %v267
      %vm269 = vweird.f32 %v261
      %vm270 = vweird.f32 %v263
      %vm271 = vmor %vm269, %vm270
      %v272 = vsel %vm271, %v263, %v268
      %v273 = vrsqrt.pop %v262
      %v274 = vmul.f32 %v273, %v262
      %v275 = vmul.f32 %v274, %v273
      %v276 = vmul.f32 0.5, %v275
      %v277 = vsub.f32 1.5, %v276
      %v278 = vmul.f32 %v273, %v277
      %vm279 = vweird.f32 %v262
      %vm280 = vweird.f32 %v273
      %vm281 = vmor %vm279, %vm280
      %v282 = vsel %vm281, %v273, %v278
      %v283 = vld [vmem:[%s1] sm:$0xf]
      %v284 = vld [vmem:[%s2] sm:$0xf]
      %v287 = vrot.slane %v254, 4
      %v288 = vsel %vm217, %v253, %v287
      %v290 = vsub.f32 %v210, %v288
      %v293 = vrot.slane %v282, 4
      %v294 = vsel %vm217, %v272, %v293
      %v296 = vmul.f32 %v290, %v294
      %298 = vset.pattern.permute.xlu0 0
      %299 = vperm.xlu0 %298, %v283
      %v300 = vpop.permute.xlu0 %299
      %v302 = vunpack.c.l.s4 839922192
      %v303 = vunpack.c.0.s8 %v302
      %v304 = vperm.slane %v300, %v303
      %v306 = vmul.f32 %v296, %v304
      %308 = vset.pattern.permute.xlu0 0
      %309 = vperm.xlu0 %308, %v284
      %v310 = vpop.permute.xlu0 %309
      %v312 = vunpack.c.l.s4 839922192
      %v313 = vunpack.c.0.s8 %v312
      %v314 = vperm.slane %v310, %v313
      %v316 = vadd.f32 %v306, %v314
      %317 = vst [vmem:[%s208] sm:$0xff] %v316
      %s318 = smul.u32 2, %s19
      %p319 = scmp.lt.s32.totalorder %s18, 1
      %s320 = scalar_select %p319, %s18, 1
      %p321 = scmp.lt.s32.totalorder %s318, 1
      %s322 = scalar_select %p321, %s318, 1
      %s323 = smul.addr %s320, 2
      %s324 = sadd.s32 %s322, %s323
      %s325 = smul.addr %s324, 4
      %s326 = scalar_lea.vmem %s3, %s325
      // Predicated region
      $region33: #{layernorm.1} parent=31 // pred_check
        %p327 = pneg %p116
      $region34: #{layernorm.1} parent=31 // pred_check_branch
        %329 = sbr.rel (%p327) target = $region36
      $region35: #{layernorm.1} parent=31 // pred_region
        %s330 = smul.u32 2, %s19
      $region36: #{layernorm.1} parent=31 // pred_fallthru
        _
    $region32: #{layernorm.1} parent=5 // pred_fallthru
      _
    %p331 = scmp.le.s32.totalorder 2, %s9
    // Predicated region
    $region37: #{layernorm.1} parent=5 // pred_check
      %p332 = pneg %p331
    $region38: #{layernorm.1} parent=5 // pred_check_branch
      %334 = sbr.rel (%p332) target = $region40
    $region39: #{layernorm.1} parent=5 // pred_region
      %s335 = ssub.s32 %s9, 2
      // Predicated region
      $region41: #{layernorm.1} parent=39 // pred_check
        %p336 = pneg %p122
      $region42: #{layernorm.1} parent=39 // pred_check_branch
        %338 = sbr.rel (%p336) target = $region44
      $region43: #{layernorm.1} parent=39 // pred_region
        %s339 = smul.u32 2, %s21
        %p340 = scmp.lt.s32.totalorder %s20, 1
        %s341 = scalar_select %p340, %s20, 1
        %p342 = scmp.lt.s32.totalorder %s339, 1
        %s343 = scalar_select %p342, %s339, 1
        %s344 = smul.addr %s341, 2
        %s345 = sadd.s32 %s343, %s344
        %s346 = smul.addr %s345, 4
        %s347 = scalar_lea.vmem %s3, %s346
      $region44: #{layernorm.1} parent=39 // pred_fallthru
        _
    $region40: #{layernorm.1} parent=5 // pred_fallthru
      _
  $region6: #{layernorm.1} parent=0 // loop_footer
    %s13 = sadd.s32 1, %s9
  $region7: #{layernorm.1} parent=0 // loop_footer_branch
    %8 = sbr.rel target = $region3
  $region8: #{layernorm.1} parent=0 // loop_exit
    _

</llo_original>
